<compile_context>
chip_gen: v7x
topology: tpu7x:2x2x1
jax: 0.10.0
libtpu: 0.0.40
codegen_flags: <defaults>
</compile_context>

<pallas_src>
import jax
import jax.numpy as jnp
from jax import lax
from jax.experimental import pallas as pl
from jax.experimental.pallas import tpu as pltpu


_MIN_DMA_ROW_BYTES = 512        # each DMA'd row >= 512 B (dtype-scaled lane width)
_ROW_BYTES_BUDGET = 4 << 20     # per input buffer; double-buffered -> 8 MiB VMEM
_SPLIT_ROWS_MIN = 2048          # above this, shape the grid as >= 2 steps (v7x megacore)
_PALLAS_MIN_ROWS = 1024         # below this many N*C rows, XLA dynamic_slice is cheaper
_VMEM_LIMIT_BYTES = 32 << 20    # explicit scoped-VMEM limit (safe on v5e/v6e/v7x)


def _round_up(x, m):
    return ((x + m - 1) // m) * m


def _choose_lane_block(hw, itemsize):
    """Lane-chunk width: >= 512 B per DMA'd row, multiple of 128, or the full row."""
    min_lanes = _round_up(max(128, _MIN_DMA_ROW_BYTES // itemsize), 128)
    return min_lanes if hw >= min_lanes else hw


def _choose_row_block(rows, wblk, itemsize):
    """Row-block size: 1 grid step when possible, >= 2 steps for large N*C."""
    # Cap so a double-buffered input block stays well inside every generation's
    # scoped VMEM (v5e default 16 MiB, v7x physical 64 MiB).
    cap = max(8, (_ROW_BYTES_BUDGET // (wblk * itemsize)) // 8 * 8)
    if rows > cap:
        return cap
    if rows >= _SPLIT_ROWS_MIN:
        # Shape the grid as (at least) 2 steps so ("parallel",) lets v7x's
        # second TensorCore take half of the DMA-latency-bound gather.
        return min(cap, _round_up(pl.cdiv(rows, 2), 8))
    return rows  # single step; block equals the full folded N*C dim (always legal)


def _pixel_filter_kernel(idx_ref, flat_ref, out_ref):
    # idx_ref : SMEM int32[2] = (lane_block, lane_in_block)   (scalar prefetch)
    # flat_ref: VMEM (row_blk, wblk)  -- the lane chunk holding pixel (y, x)
    # out_ref : VMEM (row_blk, 1)
    lane = idx_ref[1]
    blk = flat_ref[...]
    lane_iota = lax.broadcasted_iota(jnp.int32, blk.shape, 1)
    picked = jnp.where(lane_iota == lane, blk, jnp.zeros_like(blk))
    # Exactly one non-zero term per row (padded / non-selected lanes are zeroed),
    # so the lane reduce is exact.
    out_ref[...] = jnp.sum(picked, axis=1, keepdims=True).astype(out_ref.dtype)


def _pixel_filter_pallas(logits_batch, y, x):
    n, c, h, w = logits_batch.shape
    rows, hw = n * c, h * w
    itemsize = jnp.dtype(logits_batch.dtype).itemsize

    # Free reshape: NCHW is contiguous, so (N, C, H, W) -> (N*C, H*W) is a view.
    flat = logits_batch.reshape(rows, hw)

    wblk = _choose_lane_block(hw, itemsize)
    row_blk = _choose_row_block(rows, wblk, itemsize)
    grid = (pl.cdiv(rows, row_blk),)

    # Flat pixel index, split into (lane-block, lane-within-block) for SMEM.
    f = y * w + x
    idx = jnp.stack([f // wblk, f % wblk]).astype(jnp.int32)

    out = pl.pallas_call(
        _pixel_filter_kernel,
        out_shape=jax.ShapeDtypeStruct((rows, 1), logits_batch.dtype),
        grid_spec=pltpu.PrefetchScalarGridSpec(
            num_scalar_prefetch=1,
            grid=grid,
            in_specs=[
                # The data-dependent gather: only the lane chunk that contains
                # flat index f is ever DMA'd from HBM.
                pl.BlockSpec((row_blk, wblk), lambda i, idx_ref: (i, idx_ref[0])),
            ],
            out_specs=pl.BlockSpec((row_blk, 1), lambda i, idx_ref: (i, 0)),
        ),
        compiler_params=pltpu.CompilerParams(
            dimension_semantics=("parallel",),  # v7x: shard row blocks across TCs
            vmem_limit_bytes=_VMEM_LIMIT_BYTES,
        ),
    )(idx, flat)
    return out.reshape(n, c)


def _pixel_filter_xla(logits_batch, y, x):
    # Cheap path for small N*C: a single dynamic_slice gather (also reads only
    # N*C elements, without the pallas_call fixed overhead).
    n, c, h, w = logits_batch.shape
    zero = jnp.zeros((), jnp.int32)
    sl = lax.dynamic_slice(logits_batch, (zero, zero, y, x), (n, c, 1, 1))
    return sl.reshape(n, c)


def pixel_filter(logits_batch, target, *, use_pallas=None):
    """JAX equivalent of PixelFilterLayer.forward(logits_batch, (y, x))."""
    n, c, h, w = logits_batch.shape
    y, x = target
    # Clamp instead of raising (see TODO(synk) above).
    y = jnp.clip(jnp.asarray(y, jnp.int32), 0, h - 1)
    x = jnp.clip(jnp.asarray(x, jnp.int32), 0, w - 1)

    if use_pallas is None:
        # Dispatch on rows = N*C: Pallas cost ~= fixed launch overhead
        # + rows * ~512 B, independent of H*W.
        use_pallas = (n * c) >= _PALLAS_MIN_ROWS

    if use_pallas:
        return _pixel_filter_pallas(logits_batch, y, x)
    return _pixel_filter_xla(logits_batch, y, x)


if __name__ == "__main__":
    key = jax.random.PRNGKey(0)
    k0, k1, k2, k3, k4 = jax.random.split(key, 5)

    # Primary small case (N, C, H, W) = (2, 4, 16, 16).
    N, C, H, W = 2, 4, 16, 16
    logits = jax.random.normal(k0, (N, C, H, W), dtype=jnp.float32)
    target = (5, 9)

    out = pixel_filter(logits, target, use_pallas=True)  # force the Pallas path
    out = jax.block_until_ready(out)
    ref = logits[:, :, target[0], target[1]]
    assert out.shape == (N, C), out.shape
    assert jnp.allclose(out, ref), (out, ref)

    # Pixel landing in the second 128-lane chunk (flat index 12*16 + 3 = 195).
    out2 = jax.block_until_ready(pixel_filter(logits, (12, 3), use_pallas=True))
    assert jnp.allclose(out2, logits[:, :, 12, 3])

    # Large N*C -> 2-step "parallel" grid (v7x megacore path) with a ragged
    # final row block (rows = 2200, row_blk = 1104).
    N2, C2, H2, W2 = 2, 1100, 16, 16
    logits2 = jax.random.normal(k1, (N2, C2, H2, W2), dtype=jnp.float32)
    out3 = jax.block_until_ready(pixel_filter(logits2, (7, 11)))  # auto -> Pallas
    assert out3.shape == (N2, C2)
    assert jnp.allclose(out3, logits2[:, :, 7, 11])

    # hw > 128 but hw % 128 != 0, pixel in the ragged last lane chunk
    # (H = W = 15 -> hw = 225, f = 14*15 + 10 = 220 -> chunk 1, lane 92).
    N3, C3, H3, W3 = 2, 8, 15, 15
    logits3 = jax.random.normal(k2, (N3, C3, H3, W3), dtype=jnp.float32)
    out4 = jax.block_until_ready(pixel_filter(logits3, (14, 10), use_pallas=True))
    assert jnp.allclose(out4, logits3[:, :, 14, 10])

    # Small spatial map (H*W < 128 lanes), plus the auto-dispatch XLA path.
    N4, C4, H4, W4 = 2, 4, 6, 7
    logits4 = jax.random.normal(k3, (N4, C4, H4, W4), dtype=jnp.float32)
    out5 = jax.block_until_ready(pixel_filter(logits4, (3, 2), use_pallas=True))
    assert jnp.allclose(out5, logits4[:, :, 3, 2])
    out6 = jax.block_until_ready(pixel_filter(logits4, (3, 2)))  # auto -> XLA
    assert jnp.allclose(out6, logits4[:, :, 3, 2])

    # bf16: dtype-scaled lane width (wblk = 256 -> 512 B rows).
    N5, C5, H5, W5 = 2, 4, 32, 32
    logits5 = jax.random.normal(k4, (N5, C5, H5, W5), dtype=jnp.float32).astype(jnp.bfloat16)
    out7 = jax.block_until_ready(pixel_filter(logits5, (17, 5), use_pallas=True))
    assert jnp.array_equal(out7, logits5[:, :, 17, 5])

    print("KERNEL_OK")
</pallas_src>

<mosaic_0001>
module attributes {stable_mosaic.version = 11 : i64} {
  func.func @_pixel_filter_kernel(%arg0: i32, %arg1: memref<2xi32, #tpu.memory_space<smem>>, %arg2: memref<8x128xf32, #tpu.memory_space<vmem>>, %arg3: memref<8x1xf32, #tpu.memory_space<vmem>>) attributes {dimension_semantics = [#tpu.dimension_semantics<parallel>], iteration_bounds = array<i64: 1>, scalar_prefetch = 1 : i64, scratch_operands = 0 : i64, tpu.core_type = #tpu.core_type<tc>, window_params = [{transform_indices = @transform_0, window_bounds = array<i64: 8, 128>}, {transform_indices = @transform_1, window_bounds = array<i64: 8, 1>}]} {
    %c1 = arith.constant 1 : index
    %0 = memref.load %arg1[%c1] : memref<2xi32, #tpu.memory_space<smem>>
    %c0 = arith.constant 0 : index
    %c0_0 = arith.constant 0 : index
    %1 = vector.load %arg2[%c0, %c0_0] : memref<8x128xf32, #tpu.memory_space<vmem>>, vector<8x128xf32>
    %2 = tpu.iota {dimensions = array<i32: 1>} : vector<8x128xi32>
    %3 = vector.broadcast %0 : i32 to vector<8x128xi32>
    %4 = arith.cmpi eq, %2, %3 : vector<8x128xi32>
    %cst = arith.constant 0.000000e+00 : f32
    %5 = vector.broadcast %cst : f32 to vector<8x128xf32>
    %6 = arith.select %4, %1, %5 : vector<8x128xi1>, vector<8x128xf32>
    %cst_1 = arith.constant dense<0.000000e+00> : vector<8xf32>
    %7 = vector.multi_reduction <add>, %6, %cst_1 [1] : vector<8x128xf32> to vector<8xf32>
    %8 = vector.shape_cast %7 : vector<8xf32> to vector<8x1xf32>
    %c0_2 = arith.constant 0 : index
    %c0_3 = arith.constant 0 : index
    %9 = vector.load %arg3[%c0_2, %c0_3] : memref<8x1xf32, #tpu.memory_space<vmem>>, vector<8x1xf32>
    tpu.vector_store %arg3[%c0_2, %c0_3], %8 {strides = array<i32>} : memref<8x1xf32, #tpu.memory_space<vmem>>, vector<8x1xf32>,
    return
  }
  func.func @transform_0(%arg0: i32, %arg1: memref<2xi32, #tpu.memory_space<smem>>) -> (i32, i32) {
    %c0 = arith.constant 0 : index
    %0 = memref.load %arg1[%c0] : memref<2xi32, #tpu.memory_space<smem>>
    %c0_i32 = arith.constant 0 : i32
    return %arg0, %0 : i32, i32
  }
  func.func @transform_1(%arg0: i32, %arg1: memref<2xi32, #tpu.memory_space<smem>>) -> (i32, i32) {
    %c0_i32 = arith.constant 0 : i32
    %c0_i32_0 = arith.constant 0 : i32
    return %arg0, %c0_i32 : i32, i32
  }
}

</mosaic_0001>

<llo_original>
// kernel: tpu_custom_call.1
$region0: #{tpu_custom_call.1}
  #allocation0 [shape = 'u32[]', space=smem, size = 0x4, offset = 0x4, fixed_abs, tag = 'smem constant byte address 0x4 - core index']
  #allocation1 [shape = 'u32[144,128]{1,0:T(1,128)}', space=vmem, size = 0x12000, scoped, tag = 'internal scratch']
  #allocation2 [shape = 's32[1]{0}', space=sflag, size = 0x4, scoped, tag = 'scoped memory for tpu_custom_call.1']
  #allocation3 [shape = 'u8[512]{0}', space=smem, size = 0x200, scoped, tag = 'prefetched SMEM operand 0']
  %s0 = inlined_call_operand.hbm [shape: s32[2], index: 0, kind: input, shape index: {}]
  %s1 = inlined_call_operand.hbm [shape: f32[8,256], index: 1, kind: input, shape index: {}]
  %s2 = inlined_call_operand.vmem [shape: f32[8,1], index: 2, kind: output, shape index: {}]
  %s3 = sld [smem:[#allocation0]]
  $region18: #{tpu_custom_call.1} parent=0
    _
  %s5 = ssub.s32 1, %s3
  %s6 = scalar_select 0, %s5, %s3
  %8 = dma.hbm_to_smem %s0, 16, [#allocation3], [#allocation2]
  %9 = dma.done [#allocation2], 16
  %10 = sfence
  $region1: #{tpu_custom_call.1} parent=0
    #allocation4 [shape = 'u8[4096]{0}', space=vmem, size = 0x1000, scoped, tag = 'input window, operand 1, single buffered']
    #allocation5 [shape = 's32[1]{0}', space=sflag, size = 0x4, scoped, tag = 'scoped memory for tpu_custom_call.1']
    %11 = vsyncpa [#allocation5], 0
    // Predicated region
    $region2: #{tpu_custom_call.1} parent=1 // pred_check
      _
    $region3: #{tpu_custom_call.1} parent=1 // pred_check_branch
      %13 = sbr.rel (0) target = $region5
    $region4: #{tpu_custom_call.1} parent=1 // pred_region
      %s14 = sld [smem:[#allocation3]]
      %s16 = ssub.s32 128, 128
      %17 = vsyncadd [#allocation5], %s16
      %s18 = smul.addr %s14, 128
      %s19 = scalar_lea.hbm %s1, %s18
      %s21 = sshll.u32 [#allocation4], 4
      %s22 = int_to_ptr.vmem [resolvable:$true] %s21
      %24 = dma.hbm_to_vmem [thread:$0]  %s19, 128, %s22, [#allocation5]
    $region5: #{tpu_custom_call.1} parent=1 // pred_fallthru
      _
    // Predicated region
    $region6: #{tpu_custom_call.1} parent=1 // pred_check
      _
    $region7: #{tpu_custom_call.1} parent=1 // pred_check_branch
      %26 = sbr.rel (0) target = $region9
    $region8: #{tpu_custom_call.1} parent=1 // pred_region
      %27 = dma.done [#allocation5], 128
    $region9: #{tpu_custom_call.1} parent=1 // pred_fallthru
      _
    %s28 = sld [smem:[#allocation3]]
    %s29 = sld [smem:[#allocation3 + $0x1]]
    %v30 = vld [vmem:[#allocation4] sm:$0xff]
    %v31 = vlaneseq
    %v32 = vand.u32 %v31, 127
    %v33 = vstv %s29
    %vm34 = vcmp.eq.s32.totalorder %v32, %v33
    %v35 = vsel %vm34, %v30, 0.0
    %36 = vadd.xlane.f32.xlu0 %v35
    %v37 = vpop.xlane.xlu0 %36
    %vm38 = vcmask 7168
    %39 = vst.msk [vmem:[%s2] sm:$0xff] %vm38, %v37
    // Predicated region
    $region10: #{tpu_custom_call.1} parent=1 // pred_check
      _
    $region11: #{tpu_custom_call.1} parent=1 // pred_check_branch
      %41 = sbr.rel (0) target = $region13
    $region12: #{tpu_custom_call.1} parent=1 // pred_region
      _
    $region13: #{tpu_custom_call.1} parent=1 // pred_fallthru
      _
    // Predicated region
    $region14: #{tpu_custom_call.1} parent=1 // pred_check
      _
    $region15: #{tpu_custom_call.1} parent=1 // pred_check_branch
      %43 = sbr.rel (0) target = $region17
    $region16: #{tpu_custom_call.1} parent=1 // pred_region
      _
    $region17: #{tpu_custom_call.1} parent=1 // pred_fallthru
      _
    %44 = vsyncpa [#allocation5], 1

</llo_original>
